<compile_context>
chip_gen: v7x
topology: tpu7x:2x2x1
jax: 0.10.0
libtpu: 0.0.40
codegen_flags: <defaults>
</compile_context>

<pallas_src>
import math
import functools

import jax
import jax.numpy as jnp
from jax.experimental import pallas as pl
from jax.experimental.pallas import tpu as pltpu

_NEG_BIG = -1e30  # large finite negative (avoids exp(-inf - -inf)=NaN in online softmax)


# ----------------------------- config ---------------------------------------
class CPMConfig:
    num_layers = 4
    hidden_size = 32
    num_attention_heads = 4
    num_key_value_heads = 2
    rms_norm_eps = 1e-6
    rope_theta = 10000.0
    qk_norm = True
    scale_depth = 1.4
    max_position_embeddings = 8192


# ----------------------------- helpers ---------------------------------------
def _pick_tile(dim, preferred, aligns=(8,)):
    """Largest aligned divisor of `dim` that is <= preferred; full dim if
    dim <= preferred (full dims always satisfy the (8,128) rule).
    TODO(synk): ragged dims > preferred with no aligned divisor fall back to the
    full dim; huge awkward shapes would need masked partial tiles instead."""
    if dim <= preferred:
        return dim
    for align in aligns:
        t = (preferred // align) * align
        while t >= align:
            if dim % t == 0:
                return t
            t -= align
    return dim


@functools.lru_cache(maxsize=None)
def _vmem_cap_bytes():
    try:
        info = pltpu.get_tpu_info()
        cap = getattr(info, "vmem_capacity_bytes", None)
        if cap:
            return int(cap)
    except Exception:
        pass
    return 64 << 20  # safe default (v7x)


def _padded_bytes(shape, itemsize):
    """VMEM bytes of an array after (8,128) sublane/lane padding."""
    sub = -(-shape[-2] // 8) * 8 if len(shape) >= 2 else 1
    lane = -(-shape[-1] // 128) * 128
    lead = 1
    for d in shape[:-2]:
        lead *= d
    return lead * sub * lane * itemsize


def _vmem_limit(block_bytes, scratch_bytes=0):
    # ~2x for double-buffered pipeline blocks + (padded) scratch + headroom,
    # clamped to 3/4 of the actual chip's VMEM capacity.
    cap = _vmem_cap_bytes()
    need = 2 * int(block_bytes) + int(scratch_bytes) + (2 << 20)
    return int(min(max(need, 4 << 20), cap * 3 // 4))


# --------------------- kernel 1: (residual add +) RMSNorm --------------------
def _rmsnorm_kernel(h_ref, w_ref, out_ref, *, eps):
    x = h_ref[...].astype(jnp.float32)
    var = jnp.mean(x * x, axis=-1, keepdims=True)
    xn = x * jax.lax.rsqrt(var + eps)
    out_ref[...] = (xn * w_ref[...].astype(jnp.float32)).astype(out_ref.dtype)


def _add_rmsnorm_kernel(h_ref, r_ref, w_ref, res_ref, out_ref, *, eps):
    x = h_ref[...].astype(jnp.float32) + r_ref[...].astype(jnp.float32)
    res_ref[...] = x.astype(res_ref.dtype)
    var = jnp.mean(x * x, axis=-1, keepdims=True)
    xn = x * jax.lax.rsqrt(var + eps)
    out_ref[...] = (xn * w_ref[...].astype(jnp.float32)).astype(out_ref.dtype)


def _norm_rows(T):
    return _pick_tile(T, 1024 if _vmem_cap_bytes() >= (96 << 20) else 512, (8,))


def rmsnorm(x, weight, eps):
    T, H = x.shape
    rows = _norm_rows(T)
    blk = 2 * rows * H * x.dtype.itemsize
    return pl.pallas_call(
        functools.partial(_rmsnorm_kernel, eps=eps),
        grid=(T // rows,),
        in_specs=[pl.BlockSpec((rows, H), lambda i: (i, 0)),
                  pl.BlockSpec((1, H), lambda i: (0, 0))],
        out_specs=pl.BlockSpec((rows, H), lambda i: (i, 0)),
        out_shape=jax.ShapeDtypeStruct((T, H), x.dtype),
        compiler_params=pltpu.CompilerParams(
            dimension_semantics=("parallel",),
            vmem_limit_bytes=_vmem_limit(blk)),
    )(x, weight.reshape(1, H))


def add_rmsnorm(hidden, residual, weight, eps):
    T, H = hidden.shape
    rows = _norm_rows(T)
    blk = 4 * rows * H * hidden.dtype.itemsize
    res, normed = pl.pallas_call(
        functools.partial(_add_rmsnorm_kernel, eps=eps),
        grid=(T // rows,),
        in_specs=[pl.BlockSpec((rows, H), lambda i: (i, 0)),
                  pl.BlockSpec((rows, H), lambda i: (i, 0)),
                  pl.BlockSpec((1, H), lambda i: (0, 0))],
        out_specs=[pl.BlockSpec((rows, H), lambda i: (i, 0)),
                   pl.BlockSpec((rows, H), lambda i: (i, 0))],
        out_shape=[jax.ShapeDtypeStruct((T, H), hidden.dtype),
                   jax.ShapeDtypeStruct((T, H), hidden.dtype)],
        compiler_params=pltpu.CompilerParams(
            dimension_semantics=("parallel",),
            vmem_limit_bytes=_vmem_limit(blk)),
    )(hidden, residual, weight.reshape(1, H))
    return res, normed


# --------------------- kernel 2: tiled matmul (+ fused scale) ----------------
def _matmul_kernel(a_ref, b_ref, o_ref, acc_ref, *, scale):
    @pl.when(pl.program_id(2) == 0)
    def _():
        acc_ref[...] = jnp.zeros_like(acc_ref)

    # Native input dtype to the MXU, f32 accumulator.
    # TODO(synk): if the model weights/activations are bf16 (not in this test),
    # feed bf16 operands here; the MXU is bf16-native and the f32 accumulator
    # keeps accuracy.
    acc_ref[...] += jnp.dot(a_ref[...], b_ref[...],
                            preferred_element_type=jnp.float32)

    @pl.when(pl.program_id(2) == pl.num_programs(2) - 1)
    def _():
        acc = acc_ref[...]
        if scale != 1.0:
            acc = acc * scale
        o_ref[...] = acc.astype(o_ref.dtype)


def matmul(a, b, scale=1.0):
    M, K = a.shape
    _, N = b.shape
    tm = _pick_tile(M, 256, (8,))
    tn = _pick_tile(N, 256, (128,))
    tk = _pick_tile(K, 512, (128,))
    isz = a.dtype.itemsize
    blk = (tm * tk + tk * tn + tm * tn) * isz
    return pl.pallas_call(
        functools.partial(_matmul_kernel, scale=float(scale)),
        grid=(M // tm, N // tn, K // tk),
        in_specs=[pl.BlockSpec((tm, tk), lambda i, j, k: (i, k)),
                  pl.BlockSpec((tk, tn), lambda i, j, k: (k, j))],
        out_specs=pl.BlockSpec((tm, tn), lambda i, j, k: (i, j)),
        out_shape=jax.ShapeDtypeStruct((M, N), a.dtype),
        scratch_shapes=[pltpu.VMEM((tm, tn), jnp.float32)],
        compiler_params=pltpu.CompilerParams(
            dimension_semantics=("parallel", "parallel", "arbitrary"),
            vmem_limit_bytes=_vmem_limit(blk, _padded_bytes((tm, tn), 4))),
    )(a, b)


# ----- kernel 3: fused qk-RMSNorm + neox RoPE + token->head-major layout -----
def _qkv_prep_kernel(q_ref, k_ref, v_ref, qw_ref, kw_ref, cos_ref, sin_ref,
                     qo_ref, ko_ref, vo_ref, *, eps, apply_norm, q_scale):
    cos = cos_ref[0]                       # (rows, D) f32: [c | c]
    sin = sin_ref[0]                       # (rows, D) f32: [-s | s]
    D = cos.shape[-1]
    d2 = D // 2
    qw = qw_ref[...].astype(jnp.float32)   # (1, D)
    kw = kw_ref[...].astype(jnp.float32)

    def _rotate_half(x):
        # [x1|x2] -> [x2|x1]
        if D % 128 == 0:
            return pltpu.roll(x, shift=d2, axis=-1)       # single XLU lane rotate
        return jnp.concatenate([x[..., d2:], x[..., :d2]], axis=-1)

    def _norm_rope(x, w, scl):
        x = x.astype(jnp.float32)
        if apply_norm:
            var = jnp.mean(x * x, axis=-1, keepdims=True)
            x = x * jax.lax.rsqrt(var + eps) * w
        o = x * cos + _rotate_half(x) * sin
        if scl != 1.0:
            o = o * scl
        return o

    Hq = q_ref.shape[2]
    Hkv = k_ref.shape[2]
    # The sublane-strided per-head reads pay the token-major -> head-major
    # relayout ONCE here, so flash attention sees aligned head-major views.
    for h in range(Hq):
        qo_ref[0, h, :, :] = _norm_rope(q_ref[0, :, h, :], qw,
                                        q_scale).astype(qo_ref.dtype)
    for h in range(Hkv):
        ko_ref[0, h, :, :] = _norm_rope(k_ref[0, :, h, :], kw,
                                        1.0).astype(ko_ref.dtype)
        vo_ref[0, h, :, :] = v_ref[0, :, h, :]            # layout pass-through


def qkv_prep(q, k, v, q_w, k_w, cos, sin, eps, apply_norm, q_scale):
    # q: (B,S,Hq,D); k,v: (B,S,Hkv,D) token-major -> outputs head-major (B,H,S,D).
    B, S, Hq, D = q.shape
    Hkv = k.shape[2]
    rows = _pick_tile(S, 256, (128, 8))
    isz = q.dtype.itemsize
    blk = 2 * rows * (Hq + 2 * Hkv) * D * isz + 2 * rows * D * 4
    q_hm, k_hm, v_hm = pl.pallas_call(
        functools.partial(_qkv_prep_kernel, eps=eps, apply_norm=apply_norm,
                          q_scale=float(q_scale)),
        grid=(B, S // rows),
        in_specs=[pl.BlockSpec((1, rows, Hq, D), lambda b, i: (b, i, 0, 0)),
                  pl.BlockSpec((1, rows, Hkv, D), lambda b, i: (b, i, 0, 0)),
                  pl.BlockSpec((1, rows, Hkv, D), lambda b, i: (b, i, 0, 0)),
                  pl.BlockSpec((1, D), lambda b, i: (0, 0)),
                  pl.BlockSpec((1, D), lambda b, i: (0, 0)),
                  pl.BlockSpec((1, rows, D), lambda b, i: (b, i, 0)),
                  pl.BlockSpec((1, rows, D), lambda b, i: (b, i, 0))],
        out_specs=[pl.BlockSpec((1, Hq, rows, D), lambda b, i: (b, 0, i, 0)),
                   pl.BlockSpec((1, Hkv, rows, D), lambda b, i: (b, 0, i, 0)),
                   pl.BlockSpec((1, Hkv, rows, D), lambda b, i: (b, 0, i, 0))],
        out_shape=[jax.ShapeDtypeStruct((B, Hq, S, D), q.dtype),
                   jax.ShapeDtypeStruct((B, Hkv, S, D), k.dtype),
                   jax.ShapeDtypeStruct((B, Hkv, S, D), v.dtype)],
        compiler_params=pltpu.CompilerParams(
            dimension_semantics=("parallel", "parallel"),
            vmem_limit_bytes=_vmem_limit(blk)),
    )(q, k, v, q_w.reshape(1, D), k_w.reshape(1, D), cos, sin)
    return q_hm, k_hm, v_hm


# --------------- kernel 4: flash-style causal GQA attention -------------------
def _flash_attn_kernel(q_ref, k_ref, v_ref, o_ref, m_ref, l_ref, acc_ref,
                       *, group, tq, tk, n_q):
    ki = pl.program_id(2)
    n_kv = pl.num_programs(2)
    qi = pl.program_id(0) % n_q
    D = q_ref.shape[-1]

    @pl.when(ki == 0)
    def _():
        m_ref[...] = jnp.full_like(m_ref, _NEG_BIG)
        l_ref[...] = jnp.zeros_like(l_ref)
        acc_ref[...] = jnp.zeros_like(acc_ref)

    q_start = qi * tq
    k_start = ki * tk
    q_last = q_start + (tq - 1)
    k_last = k_start + (tk - 1)

    def _update(masked):
        # All `group` query heads sharing this KV head stacked into one LHS:
        # ONE score matmul + ONE P@V matmul per KV tile (GQA reuse on the MXU).
        q = q_ref[0].reshape(group * tq, D)                  # (group*tq, D)
        k = k_ref[0, 0]                                      # (tk, D)
        v = v_ref[0, 0]                                      # (tk, D)
        # q @ k^T without materializing a transpose (contract both last dims).
        s = jax.lax.dot_general(q, k, (((1,), (1,)), ((), ())),
                                preferred_element_type=jnp.float32)
        if masked:
            row = jax.lax.broadcasted_iota(jnp.int32, (group * tq, tk), 0) % tq
            col = jax.lax.broadcasted_iota(jnp.int32, (group * tq, tk), 1)
            s = jnp.where(col + k_start <= row + q_start, s, _NEG_BIG)
        m_prev = m_ref[...]
        m_new = jnp.maximum(m_prev, jnp.max(s, axis=-1, keepdims=True))
        alpha = jnp.exp(m_prev - m_new)
        p = jnp.exp(s - m_new)
        l_ref[...] = alpha * l_ref[...] + jnp.sum(p, axis=-1, keepdims=True)
        acc_ref[...] = alpha * acc_ref[...] + jax.lax.dot_general(
            p.astype(v.dtype), v, (((1,), (0,)), ((), ())),
            preferred_element_type=jnp.float32)
        m_ref[...] = m_new

    # fully-visible KV tile: no mask work at all
    @pl.when(k_last <= q_start)
    def _():
        _update(masked=False)

    # diagonal KV tile: apply causal mask. Fully-masked tiles (k_start > q_last)
    # skip compute entirely (and their DMA is skipped via the clamped index_map).
    @pl.when(jnp.logical_and(k_last > q_start, k_start <= q_last))
    def _():
        _update(masked=True)

    @pl.when(ki == n_kv - 1)
    def _():
        # exact reciprocal: runs once per output, removes approx error source
        out = acc_ref[...] * pl.reciprocal(l_ref[...], approx=False)
        for g in range(group):                               # static; finalize only
            o_ref[0, :, 0, g, :] = out[g * tq:(g + 1) * tq, :].astype(o_ref.dtype)


def flash_attention(q_hm, k_hm, v_hm):
    # q_hm: (B, Hq, S, D); k_hm, v_hm: (B, Hkv, S, D)  -- head-major.
    # returns (B, S, Hkv, group, D); reshape to (T, Hq*D) is free.
    B, Hq, S, D = q_hm.shape
    Hkv = k_hm.shape[1]
    group = Hq // Hkv
    cap = _vmem_cap_bytes()
    tq = _pick_tile(S, 512 if cap >= (96 << 20) else 256, (128, 8))
    tk = _pick_tile(S, 256, (128, 8))
    n_q = S // tq
    n_kv = S // tk
    isz = q_hm.dtype.itemsize

    def q_map(bq, j, ki):
        return (bq // n_q, j, bq % n_q, 0)

    def kv_map(bq, j, ki):
        # Clamp to the causal region: above-diagonal (future) KV tiles revisit
        # the already-resident block -> no new HBM DMA for them.
        qi = bq % n_q
        last = (qi * tq + tq - 1) // tk
        return (bq // n_q, j, jnp.minimum(ki, last), 0)

    def o_map(bq, j, ki):
        return (bq // n_q, bq % n_q, j, 0, 0)

    blk = (group * tq * D + 2 * tk * D + tq * group * D) * isz
    scratch_pad = (2 * _padded_bytes((group * tq, 1), 4)
                   + _padded_bytes((group * tq, D), 4))
    return pl.pallas_call(
        functools.partial(_flash_attn_kernel, group=group, tq=tq, tk=tk, n_q=n_q),
        grid=(B * n_q, Hkv, n_kv),
        in_specs=[pl.BlockSpec((1, group, tq, D), q_map),
                  pl.BlockSpec((1, 1, tk, D), kv_map),
                  pl.BlockSpec((1, 1, tk, D), kv_map)],
        out_specs=pl.BlockSpec((1, tq, 1, group, D), o_map),
        out_shape=jax.ShapeDtypeStruct((B, S, Hkv, group, D), q_hm.dtype),
        scratch_shapes=[pltpu.VMEM((group * tq, 1), jnp.float32),
                        pltpu.VMEM((group * tq, 1), jnp.float32),
                        pltpu.VMEM((group * tq, D), jnp.float32)],
        compiler_params=pltpu.CompilerParams(
            dimension_semantics=("parallel", "parallel", "arbitrary"),
            vmem_limit_bytes=_vmem_limit(blk, scratch_pad)),
    )(q_hm, k_hm, v_hm)


# --------------------------- RoPE tables --------------------------------------
def _rope_angles(positions_flat, D, theta):
    d2 = D // 2
    inv_freq = 1.0 / (theta ** (jnp.arange(0, d2, dtype=jnp.float32) * 2.0 / D))
    ang = positions_flat.astype(jnp.float32)[:, None] * inv_freq[None, :]
    return jnp.cos(ang), jnp.sin(ang)                 # (T, D/2) each


def rope_tables(positions, D, theta):
    # positions: (B, S) -> (B, S, D) full-width duplicated cos / signed sin.
    B, S = positions.shape
    cos, sin = _rope_angles(positions.reshape(B * S), D, theta)
    cos_full = jnp.concatenate([cos, cos], axis=-1).reshape(B, S, D)
    sin_rot = jnp.concatenate([-sin, sin], axis=-1).reshape(B, S, D)
    return cos_full, sin_rot


# --------------------------- module forward ----------------------------------
def cpm_attention_block_forward(params, config, positions, hidden_states,
                                kv_cache=None, residual=None):
    B, S, H = hidden_states.shape
    T = B * S
    Hq = config.num_attention_heads
    Hkv = config.num_key_value_heads
    D = H // Hq
    q_size, kv_size = Hq * D, Hkv * D
    eps = config.rms_norm_eps

    h2 = hidden_states.reshape(T, H)
    if residual is None:
        # residual output == input; skip the zero-residual add/read entirely.
        res2 = h2
        normed = rmsnorm(h2, params["ln_w"], eps)
    else:
        res2, normed = add_rmsnorm(h2, residual.reshape(T, H), params["ln_w"], eps)

    # QKV projection (tiled matmul)
    qkv = matmul(normed, params["w_qkv"])                       # (T, q+2kv)
    q = qkv[:, :q_size].reshape(B, S, Hq, D)                    # free reshapes
    k = qkv[:, q_size:q_size + kv_size].reshape(B, S, Hkv, D)
    v = qkv[:, q_size + kv_size:].reshape(B, S, Hkv, D)

    # fused per-head qk RMSNorm + neox RoPE + token->head-major layout pass
    # (attention 1/sqrt(D) folded into q).
    cos_full, sin_rot = rope_tables(positions, D, config.rope_theta)
    q_hm, k_hm, v_hm = qkv_prep(q, k, v, params["q_norm_w"], params["k_norm_w"],
                                cos_full, sin_rot, eps, config.qk_norm,
                                q_scale=D ** -0.5)

    # TODO(synk): vLLM paged-KV-cache read/write (block tables, InputMetadata,
    # cache_event) is runtime plumbing with no clean Pallas analog here; this
    # implements the prefill path (causal flash attention on fresh K/V).
    attn = flash_attention(q_hm, k_hm, v_hm)          # (B, S, Hkv, group, D)

    # output projection with fused depth scaling (attn reshape is free)
    depth_scale = (config.scale_depth / math.sqrt(config.num_layers)
                   if config.scale_depth > 0 else 1.0)
    out = matmul(attn.reshape(T, q_size), params["w_out"], scale=depth_scale)
    return out.reshape(B, S, H), res2.reshape(B, S, H)


# --------------------------- pure-JAX reference -------------------------------
def reference_forward(params, config, positions, hidden_states, residual=None):
    B, S, H = hidden_states.shape
    T = B * S
    Hq, Hkv = config.num_attention_heads, config.num_key_value_heads
    D = H // Hq
    q_size, kv_size = Hq * D, Hkv * D
    eps = config.rms_norm_eps

    def rmsnorm_ref(x, w):
        var = jnp.mean(x.astype(jnp.float32) ** 2, axis=-1, keepdims=True)
        return (x * jax.lax.rsqrt(var + eps)) * w

    h2 = hidden_states.reshape(T, H)
    res = h2 if residual is None else h2 + residual.reshape(T, H)
    normed = rmsnorm_ref(res, params["ln_w"])

    qkv = normed @ params["w_qkv"]
    q, k, v = (qkv[:, :q_size], qkv[:, q_size:q_size + kv_size],
               qkv[:, q_size + kv_size:])
    q = q.reshape(T, Hq, D)
    k = k.reshape(T, Hkv, D)
    if config.qk_norm:
        q = rmsnorm_ref(q, params["q_norm_w"])
        k = rmsnorm_ref(k, params["k_norm_w"])

    cos, sin = _rope_angles(positions.reshape(T), D, config.rope_theta)

    def rope(x):
        d2 = D // 2
        x1, x2 = x[..., :d2], x[..., d2:]
        c, s = cos[:, None, :], sin[:, None, :]
        return jnp.concatenate([x1 * c - x2 * s, x2 * c + x1 * s], axis=-1)

    q, k = rope(q), rope(k)
    v = v.reshape(T, Hkv, D)

    q4 = q.reshape(B, S, Hq, D).transpose(0, 2, 1, 3)
    k4 = k.reshape(B, S, Hkv, D).transpose(0, 2, 1, 3)
    v4 = v.reshape(B, S, Hkv, D).transpose(0, 2, 1, 3)
    k4 = jnp.repeat(k4, Hq // Hkv, axis=1)
    v4 = jnp.repeat(v4, Hq // Hkv, axis=1)

    s = jnp.einsum("bhqd,bhkd->bhqk", q4, k4) * (D ** -0.5)
    mask = jnp.tril(jnp.ones((S, S), bool))
    s = jnp.where(mask[None, None], s, -jnp.inf)
    p = jax.nn.softmax(s, axis=-1)
    attn = jnp.einsum("bhqk,bhkd->bhqd", p, v4)
    attn2 = attn.transpose(0, 2, 1, 3).reshape(T, q_size)

    depth_scale = (config.scale_depth / math.sqrt(config.num_layers)
                   if config.scale_depth > 0 else 1.0)
    out = depth_scale * (attn2 @ params["w_out"])
    return out.reshape(B, S, H), res.reshape(B, S, H)


# --------------------------------- main ---------------------------------------
if __name__ == "__main__":
    cfg = CPMConfig()
    B, S = 2, 8
    H = cfg.hidden_size
    Hq, Hkv = cfg.num_attention_heads, cfg.num_key_value_heads
    D = H // Hq
    q_size, kv_size = Hq * D, Hkv * D

    key = jax.random.PRNGKey(0)
    k_h, k_qkv, k_out, k_res = jax.random.split(key, 4)

    hidden_states = jax.random.normal(k_h, (B, S, H), dtype=jnp.float32)
    residual_in = jax.random.normal(k_res, (B, S, H), dtype=jnp.float32)
    positions = jnp.broadcast_to(jnp.arange(S, dtype=jnp.int32), (B, S))
    # synthetic kv cache placeholder (unused in prefill path)
    kv_cache = (jnp.zeros((B, Hkv, S, D), jnp.float32),
                jnp.zeros((B, Hkv, S, D), jnp.float32))

    params = {
        "ln_w": jnp.ones((H,), jnp.float32),                     # RMSNorm init
        "q_norm_w": jnp.ones((D,), jnp.float32),
        "k_norm_w": jnp.ones((D,), jnp.float32),
        # linear weights stored pre-transposed: y = x @ W
        "w_qkv": 0.05 * jax.random.normal(k_qkv, (H, q_size + 2 * kv_size),
                                          dtype=jnp.float32),
        "w_out": 0.05 * jax.random.normal(k_out, (q_size, H), dtype=jnp.float32),
    }

    # residual=None branch
    out0, res0 = cpm_attention_block_forward(params, cfg, positions,
                                             hidden_states, kv_cache, None)
    # residual provided branch
    out1, res1 = cpm_attention_block_forward(params, cfg, positions,
                                             hidden_states, kv_cache, residual_in)
    jax.block_until_ready((out0, res0, out1, res1))

    ref_out0, ref_res0 = reference_forward(params, cfg, positions, hidden_states, None)
    ref_out1, ref_res1 = reference_forward(params, cfg, positions, hidden_states,
                                           residual_in)

    for a, b in [(out0, ref_out0), (res0, ref_res0), (out1, ref_out1), (res1, ref_res1)]:
        err = float(jnp.max(jnp.abs(a - b)))
        assert jnp.allclose(a, b, rtol=2e-3, atol=2e-3), \
            f"mismatch vs reference (max abs err {err})"

    print("KERNEL_OK")
</pallas_src>

<mosaic_0001>
module attributes {stable_mosaic.version = 11 : i64} {
  func.func @_rmsnorm_kernel(%arg0: i32, %arg1: memref<16x32xf32, #tpu.memory_space<vmem>>, %arg2: memref<1x32xf32, #tpu.memory_space<vmem>>, %arg3: memref<16x32xf32, #tpu.memory_space<vmem>>) attributes {dimension_semantics = [#tpu.dimension_semantics<parallel>], iteration_bounds = array<i64: 1>, scalar_prefetch = 0 : i64, scratch_operands = 0 : i64, tpu.core_type = #tpu.core_type<tc>, window_params = [{transform_indices = @transform_0, window_bounds = array<i64: 16, 32>}, {pipeline_mode = #tpu.pipeline_mode<synchronous>, transform_indices = @transform_1, window_bounds = array<i64: 1, 32>}, {transform_indices = @transform_2, window_bounds = array<i64: 16, 32>}]} {
    %c0 = arith.constant 0 : index
    %c0_0 = arith.constant 0 : index
    %0 = vector.load %arg1[%c0, %c0_0] : memref<16x32xf32, #tpu.memory_space<vmem>>, vector<16x32xf32>
    %1 = arith.mulf %0, %0 : vector<16x32xf32>
    %cst = arith.constant dense<0.000000e+00> : vector<16xf32>
    %2 = vector.multi_reduction <add>, %1, %cst [1] : vector<16x32xf32> to vector<16xf32>
    %3 = vector.shape_cast %2 : vector<16xf32> to vector<16x1xf32>
    %cst_1 = arith.constant 3.200000e+01 : f32
    %4 = vector.broadcast %cst_1 : f32 to vector<16x1xf32>
    %5 = arith.divf %3, %4 : vector<16x1xf32>
    %cst_2 = arith.constant 9.99999997E-7 : f32
    %6 = vector.broadcast %cst_2 : f32 to vector<16x1xf32>
    %7 = arith.addf %5, %6 : vector<16x1xf32>
    %8 = math.rsqrt %7 : vector<16x1xf32>
    %9 = vector.broadcast %8 : vector<16x1xf32> to vector<16x32xf32>
    %10 = arith.mulf %0, %9 : vector<16x32xf32>
    %c0_3 = arith.constant 0 : index
    %c0_4 = arith.constant 0 : index
    %11 = vector.load %arg2[%c0_3, %c0_4] : memref<1x32xf32, #tpu.memory_space<vmem>>, vector<1x32xf32>
    %12 = vector.broadcast %11 : vector<1x32xf32> to vector<16x32xf32>
    %13 = arith.mulf %10, %12 : vector<16x32xf32>
    %c0_5 = arith.constant 0 : index
    %c0_6 = arith.constant 0 : index
    %14 = vector.load %arg3[%c0_5, %c0_6] : memref<16x32xf32, #tpu.memory_space<vmem>>, vector<16x32xf32>
    tpu.vector_store %arg3[%c0_5, %c0_6], %13 {strides = array<i32>} : memref<16x32xf32, #tpu.memory_space<vmem>>, vector<16x32xf32>,
    return
  }
  func.func @transform_0(%arg0: i32) -> (i32, i32) {
    %c0_i32 = arith.constant 0 : i32
    %c0_i32_0 = arith.constant 0 : i32
    return %arg0, %c0_i32 : i32, i32
  }
  func.func @transform_1(%arg0: i32) -> (i32, i32) {
    %c0_i32 = arith.constant 0 : i32
    %c0_i32_0 = arith.constant 0 : i32
    %c0_i32_1 = arith.constant 0 : i32
    return %c0_i32, %c0_i32_0 : i32, i32
  }
  func.func @transform_2(%arg0: i32) -> (i32, i32) {
    %c0_i32 = arith.constant 0 : i32
    %c0_i32_0 = arith.constant 0 : i32
    return %arg0, %c0_i32 : i32, i32
  }
}

</mosaic_0001>

<llo_original>
// kernel: tpu_custom_call.1
$region0: #{tpu_custom_call.1}
  #allocation0 [shape = 'u32[]', space=smem, size = 0x4, offset = 0x4, fixed_abs, tag = 'smem constant byte address 0x4 - core index']
  #allocation1 [shape = 'u32[144,128]{1,0:T(1,128)}', space=vmem, size = 0x12000, scoped, tag = 'internal scratch']
  %s0 = inlined_call_operand.hbm [shape: f32[16,32], index: 0, kind: input, shape index: {}]
  %s1 = inlined_call_operand.vmem [shape: f32[1,32], index: 1, kind: input, shape index: {}]
  %s2 = inlined_call_operand.hbm [shape: f32[16,32], index: 2, kind: output, shape index: {}]
  %s3 = sld [smem:[#allocation0]]
  $region22: #{tpu_custom_call.1} parent=0
    _
  %s5 = ssub.s32 1, %s3
  %s6 = scalar_select 0, %s5, %s3
  $region1: #{tpu_custom_call.1} parent=0
    #allocation2 [shape = 'u8[8192]{0}', space=vmem, size = 0x2000, scoped, tag = 'input window, operand 0, single buffered']
    #allocation3 [shape = 's32[1]{0}', space=sflag, size = 0x4, scoped, tag = 'scoped memory for tpu_custom_call.1']
    #allocation4 [shape = 's32[1]{0}', space=sflag, size = 0x4, scoped, tag = 'scoped memory for tpu_custom_call.1']
    #allocation5 [shape = 'u8[8192]{0}', space=vmem, size = 0x2000, scoped, tag = 'output window, operand 0, single buffered']
    %7 = vsyncpa [#allocation3], 0
    %8 = vsyncpa [#allocation4], 0
    // Predicated region
    $region2: #{tpu_custom_call.1} parent=1 // pred_check
      _
    $region3: #{tpu_custom_call.1} parent=1 // pred_check_branch
      %10 = sbr.rel (0) target = $region5
    $region4: #{tpu_custom_call.1} parent=1 // pred_region
      %s12 = ssub.s32 256, 256
      %13 = vsyncadd [#allocation3], %s12
      %s14 = sshll.u32 [#allocation2], 4
      %s15 = int_to_ptr.vmem [resolvable:$true] %s14
      %20 = dma.hbm_to_vmem [thread:$0]  %s0, 256, %s15, [#allocation3], 128, 128, 8
    $region5: #{tpu_custom_call.1} parent=1 // pred_fallthru
      _
    // Predicated region
    $region6: #{tpu_custom_call.1} parent=1 // pred_check
      _
    $region7: #{tpu_custom_call.1} parent=1 // pred_check_branch
      %22 = sbr.rel (0) target = $region9
    $region8: #{tpu_custom_call.1} parent=1 // pred_region
      _
    $region9: #{tpu_custom_call.1} parent=1 // pred_fallthru
      _
    // Predicated region
    $region10: #{tpu_custom_call.1} parent=1 // pred_check
      _
    $region11: #{tpu_custom_call.1} parent=1 // pred_check_branch
      %24 = sbr.rel (0) target = $region13
    $region12: #{tpu_custom_call.1} parent=1 // pred_region
      %25 = dma.done [#allocation3], 256
    $region13: #{tpu_custom_call.1} parent=1 // pred_fallthru
      _
    %v26 = vld [vmem:[#allocation2] sm:$0xff]
    %v27 = vld [vmem:[#allocation2 + $0x8] sm:$0xff]
    %v28 = vmul.f32 %v26, %v26
    %v29 = vmul.f32 %v27, %v27
    %vm30 = vcmask 261120
    %v31 = vsel %vm30, %v28, 0.0
    %32 = vadd.xlane.f32.xlu0 %v31
    %v33 = vpop.xlane.xlu0 %32
    %v34 = vsel %vm30, %v29, 0.0
    %35 = vadd.xlane.f32.xlu0 %v34
    %v36 = vpop.xlane.xlu0 %35
    %v37 = vrcp.pop 32.0
    %v38 = vmul.f32 %v33, %v37
    %v39 = vmul.f32 %v36, %v37
    %v40 = vadd.f32 %v38, 1e-06
    %v41 = vadd.f32 %v39, 1e-06
    %v42 = vrsqrt.pop %v40
    %v43 = vrsqrt.pop %v41
    %v44 = vmul.f32 %v26, %v42
    %v45 = vmul.f32 %v27, %v43
    %v46 = vld [vmem:[%s1] sm:$0x1]
    %v48 = vlaneseq
    %v49 = vshrl.u32 %v48, 7
    %v50 = vsub.s32 0, %v49
    %v51 = vrot.slane %v46, %v50
    %v53 = vmul.f32 %v44, %v51
    %v54 = vmul.f32 %v45, %v51
    %55 = vst.msk [vmem:[#allocation5] sm:$0xff] %vm30, %v53
    %56 = vst.msk [vmem:[#allocation5 + $0x8] sm:$0xff] %vm30, %v54
    // Predicated region
    $region14: #{tpu_custom_call.1} parent=1 // pred_check
      _
    $region15: #{tpu_custom_call.1} parent=1 // pred_check_branch
      %58 = sbr.rel (0) target = $region17
    $region16: #{tpu_custom_call.1} parent=1 // pred_region
      %s60 = ssub.s32 256, 256
      %61 = vsyncadd [#allocation4], %s60
      %s62 = sshll.u32 [#allocation5], 4
      %s63 = int_to_ptr.vmem [resolvable:$true] %s62
      %68 = dma.vmem_to_hbm [thread:$0]  %s63, 256, %s2, [#allocation4], 128, 128, 8
    $region17: #{tpu_custom_call.1} parent=1 // pred_fallthru
      _
    // Predicated region
    $region18: #{tpu_custom_call.1} parent=1 // pred_check
      _
    $region19: #{tpu_custom_call.1} parent=1 // pred_check_branch
      %70 = sbr.rel (0) target = $region21
    $region20: #{tpu_custom_call.1} parent=1 // pred_region
      %71 = dma.done [#allocation4], 256
    $region21: #{tpu_custom_call.1} parent=1 // pred_fallthru
      _
    %72 = vsyncpa [#allocation3], 1
    %73 = vsyncpa [#allocation4], 1

</llo_original>
